<compile_context>
chip_gen: v6e
topology: v6e:2x2x1
jax: 0.10.0
libtpu: 0.0.40
codegen_flags: <defaults>
</compile_context>

<pallas_src>
import jax
import jax.numpy as jnp
from jax.experimental import pallas as pl
from jax.experimental.pallas import tpu as pltpu

_LANES = 128
_ROW_ALIGN = 32          # keeps both f32 and int8/bool output tiles unmasked
_MAX_TILE_ROWS = 2048    # 1 MiB f32 input tile -> ~11 MiB total double-buffered
                         # VMEM (1 f32 in + 4 f32 out + 2 byte-wide out), safe
                         # under v5e's 16 MiB and v7x's 32 MiB scoped defaults.


def _elementwise_kernel(x_ref, sum_ref, diff_ref, prod_ref, div_ref,
                        gt_ref, le_ref):
    x = x_ref[...]
    sum_ref[...] = x + 2.0
    diff_ref[...] = x - 3.0
    prod_ref[...] = x * 4.0
    div_ref[...] = x / 5.0                       # exact parity with torch x / 5
    gt_ref[...] = (x > 1.0).astype(gt_ref.dtype)
    le_ref[...] = (x <= 3.0).astype(le_ref.dtype)


def _build_call(rows, tile_rows, cmp_dtype):
    f32_out = jax.ShapeDtypeStruct((rows, _LANES), jnp.float32)
    cmp_out = jax.ShapeDtypeStruct((rows, _LANES), cmp_dtype)
    spec = pl.BlockSpec((tile_rows, _LANES), lambda i: (i, 0))
    nelem = rows * _LANES
    cmp_bytes = jnp.dtype(cmp_dtype).itemsize
    cost = pl.CostEstimate(
        flops=6 * nelem,
        transcendentals=0,
        bytes_accessed=nelem * (4 * 5 + 2 * cmp_bytes),
    )
    return pl.pallas_call(
        _elementwise_kernel,
        out_shape=(f32_out, f32_out, f32_out, f32_out, cmp_out, cmp_out),
        grid=(pl.cdiv(rows, tile_rows),),
        in_specs=[spec],
        out_specs=(spec,) * 6,
        compiler_params=pltpu.CompilerParams(
            dimension_semantics=("parallel",)),
        cost_estimate=cost,
    )


def pt_module_forward(x):
    """Returns (x+2, x-3, x*4, x/5, x>1, x<=3) with PyTorch-matching dtypes."""
    orig_shape = x.shape
    total = x.size

    x_flat = x.reshape(-1).astype(jnp.float32)
    chunk = _ROW_ALIGN * _LANES
    padded_total = ((total + chunk - 1) // chunk) * chunk
    if padded_total != total:
        x_flat = jnp.pad(x_flat, (0, padded_total - total))
    rows = padded_total // _LANES
    tile_rows = min(_MAX_TILE_ROWS, rows)
    x2d = x_flat.reshape(rows, _LANES)

    # Prefer bool outputs straight from the kernel (saves a full extra
    # read/write pass over both comparison arrays); fall back to int8 + cast
    # if bool I/O does not lower on this JAX version.
    try:
        outs = _build_call(rows, tile_rows, jnp.bool_)(x2d)
    except Exception:
        outs = _build_call(rows, tile_rows, jnp.int8)(x2d)

    def _unflatten(a):
        return a.reshape(-1)[:total].reshape(orig_shape)

    sum_r, diff_r, prod_r, div_r, gt_r, le_r = outs
    return (
        _unflatten(sum_r),
        _unflatten(diff_r),
        _unflatten(prod_r),
        _unflatten(div_r),
        _unflatten(gt_r).astype(jnp.bool_),   # no-op if already bool
        _unflatten(le_r).astype(jnp.bool_),
    )


if __name__ == "__main__":
    key = jax.random.PRNGKey(0)
    x = jax.random.normal(key, (2, 4, 16, 16), dtype=jnp.float32) * 3.0

    outs = pt_module_forward(x)
    outs = jax.block_until_ready(outs)

    refs = (x + 2, x - 3, x * 4, x / 5, x > 1, x <= 3)
    ok = True
    for got, ref in zip(outs, refs):
        assert got.shape == ref.shape, (got.shape, ref.shape)
        assert got.dtype == ref.dtype, (got.dtype, ref.dtype)
        if got.dtype == jnp.bool_:
            ok &= bool(jnp.all(got == ref))
        else:
            ok &= bool(jnp.allclose(got, ref, atol=0.0, rtol=0.0))
    assert ok, "mismatch vs reference"

    print("KERNEL_OK")
</pallas_src>

<mosaic_0001>
module attributes {stable_mosaic.version = 11 : i64} {
  func.func @_elementwise_kernel(%arg0: i32, %arg1: memref<32x128xf32, #tpu.memory_space<vmem>>, %arg2: memref<32x128xf32, #tpu.memory_space<vmem>>, %arg3: memref<32x128xf32, #tpu.memory_space<vmem>>, %arg4: memref<32x128xf32, #tpu.memory_space<vmem>>, %arg5: memref<32x128xf32, #tpu.memory_space<vmem>>, %arg6: memref<32x128xi32, #tpu.memory_space<vmem>>, %arg7: memref<32x128xi32, #tpu.memory_space<vmem>>) attributes {dimension_semantics = [#tpu.dimension_semantics<parallel>], iteration_bounds = array<i64: 1>, scalar_prefetch = 0 : i64, scratch_operands = 0 : i64, tpu.core_type = #tpu.core_type<tc>, window_params = [{transform_indices = @transform_0, window_bounds = array<i64: 32, 128>}, {transform_indices = @transform_1, window_bounds = array<i64: 32, 128>}, {transform_indices = @transform_2, window_bounds = array<i64: 32, 128>}, {transform_indices = @transform_3, window_bounds = array<i64: 32, 128>}, {transform_indices = @transform_4, window_bounds = array<i64: 32, 128>}, {transform_indices = @transform_5, window_bounds = array<i64: 32, 128>}, {transform_indices = @transform_6, window_bounds = array<i64: 32, 128>}]} {
    %c0 = arith.constant 0 : index
    %c0_0 = arith.constant 0 : index
    %0 = vector.load %arg1[%c0, %c0_0] : memref<32x128xf32, #tpu.memory_space<vmem>>, vector<32x128xf32>
    %cst = arith.constant 2.000000e+00 : f32
    %1 = vector.broadcast %cst : f32 to vector<32x128xf32>
    %2 = arith.addf %0, %1 : vector<32x128xf32>
    %c0_1 = arith.constant 0 : index
    %c0_2 = arith.constant 0 : index
    %3 = vector.load %arg2[%c0_1, %c0_2] : memref<32x128xf32, #tpu.memory_space<vmem>>, vector<32x128xf32>
    tpu.vector_store %arg2[%c0_1, %c0_2], %2 {strides = array<i32>} : memref<32x128xf32, #tpu.memory_space<vmem>>, vector<32x128xf32>,
    %cst_3 = arith.constant 3.000000e+00 : f32
    %4 = vector.broadcast %cst_3 : f32 to vector<32x128xf32>
    %5 = arith.subf %0, %4 : vector<32x128xf32>
    %c0_4 = arith.constant 0 : index
    %c0_5 = arith.constant 0 : index
    %6 = vector.load %arg3[%c0_4, %c0_5] : memref<32x128xf32, #tpu.memory_space<vmem>>, vector<32x128xf32>
    tpu.vector_store %arg3[%c0_4, %c0_5], %5 {strides = array<i32>} : memref<32x128xf32, #tpu.memory_space<vmem>>, vector<32x128xf32>,
    %cst_6 = arith.constant 4.000000e+00 : f32
    %7 = vector.broadcast %cst_6 : f32 to vector<32x128xf32>
    %8 = arith.mulf %0, %7 : vector<32x128xf32>
    %c0_7 = arith.constant 0 : index
    %c0_8 = arith.constant 0 : index
    %9 = vector.load %arg4[%c0_7, %c0_8] : memref<32x128xf32, #tpu.memory_space<vmem>>, vector<32x128xf32>
    tpu.vector_store %arg4[%c0_7, %c0_8], %8 {strides = array<i32>} : memref<32x128xf32, #tpu.memory_space<vmem>>, vector<32x128xf32>,
    %cst_9 = arith.constant 5.000000e+00 : f32
    %10 = vector.broadcast %cst_9 : f32 to vector<32x128xf32>
    %11 = arith.divf %0, %10 : vector<32x128xf32>
    %c0_10 = arith.constant 0 : index
    %c0_11 = arith.constant 0 : index
    %12 = vector.load %arg5[%c0_10, %c0_11] : memref<32x128xf32, #tpu.memory_space<vmem>>, vector<32x128xf32>
    tpu.vector_store %arg5[%c0_10, %c0_11], %11 {strides = array<i32>} : memref<32x128xf32, #tpu.memory_space<vmem>>, vector<32x128xf32>,
    %cst_12 = arith.constant 1.000000e+00 : f32
    %13 = vector.broadcast %cst_12 : f32 to vector<32x128xf32>
    %14 = arith.cmpf ogt, %0, %13 : vector<32x128xf32>
    %c0_13 = arith.constant 0 : index
    %c0_14 = arith.constant 0 : index
    %15 = vector.load %arg6[%c0_13, %c0_14] : memref<32x128xi32, #tpu.memory_space<vmem>>, vector<32x128xi32>
    %16 = arith.extui %14 : vector<32x128xi1> to vector<32x128xi32>
    %cst_15 = arith.constant dense<0> : vector<32x128xi32>
    %17 = arith.cmpi ne, %15, %cst_15 : vector<32x128xi32>
    tpu.vector_store %arg6[%c0_13, %c0_14], %16 {strides = array<i32>} : memref<32x128xi32, #tpu.memory_space<vmem>>, vector<32x128xi32>,
    %cst_16 = arith.constant 3.000000e+00 : f32
    %18 = vector.broadcast %cst_16 : f32 to vector<32x128xf32>
    %19 = arith.cmpf ole, %0, %18 : vector<32x128xf32>
    %c0_17 = arith.constant 0 : index
    %c0_18 = arith.constant 0 : index
    %20 = vector.load %arg7[%c0_17, %c0_18] : memref<32x128xi32, #tpu.memory_space<vmem>>, vector<32x128xi32>
    %21 = arith.extui %19 : vector<32x128xi1> to vector<32x128xi32>
    %cst_19 = arith.constant dense<0> : vector<32x128xi32>
    %22 = arith.cmpi ne, %20, %cst_19 : vector<32x128xi32>
    tpu.vector_store %arg7[%c0_17, %c0_18], %21 {strides = array<i32>} : memref<32x128xi32, #tpu.memory_space<vmem>>, vector<32x128xi32>,
    return
  }
  func.func @transform_0(%arg0: i32) -> (i32, i32) {
    %c0_i32 = arith.constant 0 : i32
    %c0_i32_0 = arith.constant 0 : i32
    return %arg0, %c0_i32 : i32, i32
  }
  func.func @transform_1(%arg0: i32) -> (i32, i32) {
    %c0_i32 = arith.constant 0 : i32
    %c0_i32_0 = arith.constant 0 : i32
    return %arg0, %c0_i32 : i32, i32
  }
  func.func @transform_2(%arg0: i32) -> (i32, i32) {
    %c0_i32 = arith.constant 0 : i32
    %c0_i32_0 = arith.constant 0 : i32
    return %arg0, %c0_i32 : i32, i32
  }
  func.func @transform_3(%arg0: i32) -> (i32, i32) {
    %c0_i32 = arith.constant 0 : i32
    %c0_i32_0 = arith.constant 0 : i32
    return %arg0, %c0_i32 : i32, i32
  }
  func.func @transform_4(%arg0: i32) -> (i32, i32) {
    %c0_i32 = arith.constant 0 : i32
    %c0_i32_0 = arith.constant 0 : i32
    return %arg0, %c0_i32 : i32, i32
  }
  func.func @transform_5(%arg0: i32) -> (i32, i32) {
    %c0_i32 = arith.constant 0 : i32
    %c0_i32_0 = arith.constant 0 : i32
    return %arg0, %c0_i32 : i32, i32
  }
  func.func @transform_6(%arg0: i32) -> (i32, i32) {
    %c0_i32 = arith.constant 0 : i32
    %c0_i32_0 = arith.constant 0 : i32
    return %arg0, %c0_i32 : i32, i32
  }
}

module attributes {stable_mosaic.version = 11 : i64} {
  func.func @_elementwise_kernel(%arg0: i32, %arg1: memref<32x128xf32, #tpu.memory_space<vmem>>, %arg2: memref<32x128xf32, #tpu.memory_space<vmem>>, %arg3: memref<32x128xf32, #tpu.memory_space<vmem>>, %arg4: memref<32x128xf32, #tpu.memory_space<vmem>>, %arg5: memref<32x128xf32, #tpu.memory_space<vmem>>, %arg6: memref<32x128xi8, #tpu.memory_space<vmem>>, %arg7: memref<32x128xi8, #tpu.memory_space<vmem>>) attributes {dimension_semantics = [#tpu.dimension_semantics<parallel>], iteration_bounds = array<i64: 1>, scalar_prefetch = 0 : i64, scratch_operands = 0 : i64, tpu.core_type = #tpu.core_type<tc>, window_params = [{transform_indices = @transform_0, window_bounds = array<i64: 32, 128>}, {transform_indices = @transform_1, window_bounds = array<i64: 32, 128>}, {transform_indices = @transform_2, window_bounds = array<i64: 32, 128>}, {transform_indices = @transform_3, window_bounds = array<i64: 32, 128>}, {transform_indices = @transform_4, window_bounds = array<i64: 32, 128>}, {transform_indices = @transform_5, window_bounds = array<i64: 32, 128>}, {transform_indices = @transform_6, window_bounds = array<i64: 32, 128>}]} {
    %c0 = arith.constant 0 : index
    %c0_0 = arith.constant 0 : index
    %0 = vector.load %arg1[%c0, %c0_0] : memref<32x128xf32, #tpu.memory_space<vmem>>, vector<32x128xf32>
    %cst = arith.constant 2.000000e+00 : f32
    %1 = vector.broadcast %cst : f32 to vector<32x128xf32>
    %2 = arith.addf %0, %1 : vector<32x128xf32>
    %c0_1 = arith.constant 0 : index
    %c0_2 = arith.constant 0 : index
    %3 = vector.load %arg2[%c0_1, %c0_2] : memref<32x128xf32, #tpu.memory_space<vmem>>, vector<32x128xf32>
    tpu.vector_store %arg2[%c0_1, %c0_2], %2 {strides = array<i32>} : memref<32x128xf32, #tpu.memory_space<vmem>>, vector<32x128xf32>,
    %cst_3 = arith.constant 3.000000e+00 : f32
    %4 = vector.broadcast %cst_3 : f32 to vector<32x128xf32>
    %5 = arith.subf %0, %4 : vector<32x128xf32>
    %c0_4 = arith.constant 0 : index
    %c0_5 = arith.constant 0 : index
    %6 = vector.load %arg3[%c0_4, %c0_5] : memref<32x128xf32, #tpu.memory_space<vmem>>, vector<32x128xf32>
    tpu.vector_store %arg3[%c0_4, %c0_5], %5 {strides = array<i32>} : memref<32x128xf32, #tpu.memory_space<vmem>>, vector<32x128xf32>,
    %cst_6 = arith.constant 4.000000e+00 : f32
    %7 = vector.broadcast %cst_6 : f32 to vector<32x128xf32>
    %8 = arith.mulf %0, %7 : vector<32x128xf32>
    %c0_7 = arith.constant 0 : index
    %c0_8 = arith.constant 0 : index
    %9 = vector.load %arg4[%c0_7, %c0_8] : memref<32x128xf32, #tpu.memory_space<vmem>>, vector<32x128xf32>
    tpu.vector_store %arg4[%c0_7, %c0_8], %8 {strides = array<i32>} : memref<32x128xf32, #tpu.memory_space<vmem>>, vector<32x128xf32>,
    %cst_9 = arith.constant 5.000000e+00 : f32
    %10 = vector.broadcast %cst_9 : f32 to vector<32x128xf32>
    %11 = arith.divf %0, %10 : vector<32x128xf32>
    %c0_10 = arith.constant 0 : index
    %c0_11 = arith.constant 0 : index
    %12 = vector.load %arg5[%c0_10, %c0_11] : memref<32x128xf32, #tpu.memory_space<vmem>>, vector<32x128xf32>
    tpu.vector_store %arg5[%c0_10, %c0_11], %11 {strides = array<i32>} : memref<32x128xf32, #tpu.memory_space<vmem>>, vector<32x128xf32>,
    %cst_12 = arith.constant 1.000000e+00 : f32
    %13 = vector.broadcast %cst_12 : f32 to vector<32x128xf32>
    %14 = arith.cmpf ogt, %0, %13 : vector<32x128xf32>
    %15 = arith.extui %14 : vector<32x128xi1> to vector<32x128xi8>
    %c0_13 = arith.constant 0 : index
    %c0_14 = arith.constant 0 : index
    %16 = vector.load %arg6[%c0_13, %c0_14] : memref<32x128xi8, #tpu.memory_space<vmem>>, vector<32x128xi8>
    tpu.vector_store %arg6[%c0_13, %c0_14], %15 {strides = array<i32>} : memref<32x128xi8, #tpu.memory_space<vmem>>, vector<32x128xi8>,
    %cst_15 = arith.constant 3.000000e+00 : f32
    %17 = vector.broadcast %cst_15 : f32 to vector<32x128xf32>
    %18 = arith.cmpf ole, %0, %17 : vector<32x128xf32>
    %19 = arith.extui %18 : vector<32x128xi1> to vector<32x128xi8>
    %c0_16 = arith.constant 0 : index
    %c0_17 = arith.constant 0 : index
    %20 = vector.load %arg7[%c0_16, %c0_17] : memref<32x128xi8, #tpu.memory_space<vmem>>, vector<32x128xi8>
    tpu.vector_store %arg7[%c0_16, %c0_17], %19 {strides = array<i32>} : memref<32x128xi8, #tpu.memory_space<vmem>>, vector<32x128xi8>,
    return
  }
  func.func @transform_0(%arg0: i32) -> (i32, i32) {
    %c0_i32 = arith.constant 0 : i32
    %c0_i32_0 = arith.constant 0 : i32
    return %arg0, %c0_i32 : i32, i32
  }
  func.func @transform_1(%arg0: i32) -> (i32, i32) {
    %c0_i32 = arith.constant 0 : i32
    %c0_i32_0 = arith.constant 0 : i32
    return %arg0, %c0_i32 : i32, i32
  }
  func.func @transform_2(%arg0: i32) -> (i32, i32) {
    %c0_i32 = arith.constant 0 : i32
    %c0_i32_0 = arith.constant 0 : i32
    return %arg0, %c0_i32 : i32, i32
  }
  func.func @transform_3(%arg0: i32) -> (i32, i32) {
    %c0_i32 = arith.constant 0 : i32
    %c0_i32_0 = arith.constant 0 : i32
    return %arg0, %c0_i32 : i32, i32
  }
  func.func @transform_4(%arg0: i32) -> (i32, i32) {
    %c0_i32 = arith.constant 0 : i32
    %c0_i32_0 = arith.constant 0 : i32
    return %arg0, %c0_i32 : i32, i32
  }
  func.func @transform_5(%arg0: i32) -> (i32, i32) {
    %c0_i32 = arith.constant 0 : i32
    %c0_i32_0 = arith.constant 0 : i32
    return %arg0, %c0_i32 : i32, i32
  }
  func.func @transform_6(%arg0: i32) -> (i32, i32) {
    %c0_i32 = arith.constant 0 : i32
    %c0_i32_0 = arith.constant 0 : i32
    return %arg0, %c0_i32 : i32, i32
  }
}

</mosaic_0001>

<llo_original>
// kernel: tpu_custom_call.1
$region0: #{tpu_custom_call.1}
  #allocation0 [shape = 'u32[]', space=smem, size = 0x4, offset = 0x4, fixed_abs, tag = 'smem constant byte address 0x4 - core index']
  #allocation1 [shape = 'u32[144,128]{1,0:T(1,128)}', space=vmem, size = 0x12000, scoped, tag = 'internal scratch']
  %s0 = inlined_call_operand.hbm [shape: f32[32,128], index: 0, kind: input, shape index: {}]
  %s1 = inlined_call_operand.hbm [shape: f32[32,128], index: 1, kind: output, shape index: {0}]
  %s2 = inlined_call_operand.hbm [shape: f32[32,128], index: 2, kind: output, shape index: {1}]
  %s3 = inlined_call_operand.hbm [shape: f32[32,128], index: 3, kind: output, shape index: {2}]
  %s4 = inlined_call_operand.hbm [shape: f32[32,128], index: 4, kind: output, shape index: {3}]
  %s5 = inlined_call_operand.vmem [shape: s32[32,128], index: 5, kind: output, shape index: {4}]
  %s6 = inlined_call_operand.vmem [shape: s32[32,128], index: 6, kind: output, shape index: {5}]
  %7 = xla_tuple %s1, %s2, %s3, %s4, %s5, %s6
  %s8 = sld [smem:[#allocation0]]
  $region58: #{tpu_custom_call.1} parent=0
    _
  %s10 = ssub.s32 1, %s8
  %s11 = scalar_select 0, %s10, %s8
  $region1: #{tpu_custom_call.1} parent=0
    #allocation2 [shape = 'u8[16384]{0}', space=vmem, size = 0x4000, scoped, tag = 'input window, operand 0, single buffered']
    #allocation3 [shape = 's32[1]{0}', space=sflag, size = 0x4, scoped, tag = 'scoped memory for tpu_custom_call.1']
    #allocation4 [shape = 's32[1]{0}', space=sflag, size = 0x4, scoped, tag = 'scoped memory for tpu_custom_call.1']
    #allocation5 [shape = 'u8[16384]{0}', space=vmem, size = 0x4000, scoped, tag = 'output window, operand 0, single buffered']
    #allocation6 [shape = 'u8[16384]{0}', space=vmem, size = 0x4000, scoped, tag = 'output window, operand 1, single buffered']
    #allocation7 [shape = 's32[1]{0}', space=sflag, size = 0x4, scoped, tag = 'scoped memory for tpu_custom_call.1']
    #allocation8 [shape = 'u8[16384]{0}', space=vmem, size = 0x4000, scoped, tag = 'output window, operand 2, single buffered']
    #allocation9 [shape = 'u8[16384]{0}', space=vmem, size = 0x4000, scoped, tag = 'output window, operand 3, single buffered']
    #allocation10 [shape = 's32[1]{0}', space=sflag, size = 0x4, scoped, tag = 'scoped memory for tpu_custom_call.1']
    %12 = vsyncpa [#allocation3], 0
    %13 = vsyncpa [#allocation4], 0
    %14 = vsyncpa [#allocation7], 0
    %15 = vsyncpa [#allocation10], 0
    // Predicated region
    $region2: #{tpu_custom_call.1} parent=1 // pred_check
      _
    $region3: #{tpu_custom_call.1} parent=1 // pred_check_branch
      %17 = sbr.rel (0) target = $region5
    $region4: #{tpu_custom_call.1} parent=1 // pred_region
      %s19 = ssub.s32 512, 512
      %20 = vsyncadd [#allocation3], %s19
      %s21 = sshll.u32 [#allocation2], 4
      %s22 = int_to_ptr.vmem [resolvable:$true] %s21
      %27 = dma.hbm_to_vmem [thread:$0]  %s0, 512, %s22, [#allocation3], 128, 128, 8
    $region5: #{tpu_custom_call.1} parent=1 // pred_fallthru
      _
    // Predicated region
    $region6: #{tpu_custom_call.1} parent=1 // pred_check
      _
    $region7: #{tpu_custom_call.1} parent=1 // pred_check_branch
      %29 = sbr.rel (0) target = $region9
    $region8: #{tpu_custom_call.1} parent=1 // pred_region
      %30 = dma.done [#allocation3], 512
    $region9: #{tpu_custom_call.1} parent=1 // pred_fallthru
      _
    %v31 = vld [vmem:[#allocation2] sm:$0xff]
    %v32 = vld [vmem:[#allocation2 + $0x8] sm:$0xff]
    %v33 = vld [vmem:[#allocation2 + $0x10] sm:$0xff]
    %v34 = vld [vmem:[#allocation2 + $0x18] sm:$0xff]
    %v35 = vadd.f32 %v31, 2.0
    %v36 = vadd.f32 %v32, 2.0
    %v37 = vadd.f32 %v33, 2.0
    %v38 = vadd.f32 %v34, 2.0
    %39 = vst [vmem:[#allocation5] sm:$0xff] %v35
    %40 = vst [vmem:[#allocation5 + $0x8] sm:$0xff] %v36
    %41 = vst [vmem:[#allocation5 + $0x10] sm:$0xff] %v37
    %42 = vst [vmem:[#allocation5 + $0x18] sm:$0xff] %v38
    %v43 = vsub.f32 %v31, 3.0
    %v44 = vsub.f32 %v32, 3.0
    %v45 = vsub.f32 %v33, 3.0
    %v46 = vsub.f32 %v34, 3.0
    %47 = vst [vmem:[#allocation6] sm:$0xff] %v43
    %48 = vst [vmem:[#allocation6 + $0x8] sm:$0xff] %v44
    %49 = vst [vmem:[#allocation6 + $0x10] sm:$0xff] %v45
    %50 = vst [vmem:[#allocation6 + $0x18] sm:$0xff] %v46
    %v51 = vmul.f32 %v31, 4.0
    %v52 = vmul.f32 %v32, 4.0
    %v53 = vmul.f32 %v33, 4.0
    %v54 = vmul.f32 %v34, 4.0
    %55 = vst [vmem:[#allocation8] sm:$0xff] %v51
    %56 = vst [vmem:[#allocation8 + $0x8] sm:$0xff] %v52
    %57 = vst [vmem:[#allocation8 + $0x10] sm:$0xff] %v53
    %58 = vst [vmem:[#allocation8 + $0x18] sm:$0xff] %v54
    %v59 = vrcp.pop 5.0
    %v60 = vmul.f32 %v31, %v59
    %v61 = vmul.f32 %v32, %v59
    %v62 = vmul.f32 %v33, %v59
    %v63 = vmul.f32 %v34, %v59
    %64 = vst [vmem:[#allocation9] sm:$0xff] %v60
    %65 = vst [vmem:[#allocation9 + $0x8] sm:$0xff] %v61
    %66 = vst [vmem:[#allocation9 + $0x10] sm:$0xff] %v62
    %67 = vst [vmem:[#allocation9 + $0x18] sm:$0xff] %v63
    %vm68 = vcmp.gt.f32.partialorder %v31, 1.0
    %vm69 = vcmp.gt.f32.partialorder %v32, 1.0
    %vm70 = vcmp.gt.f32.partialorder %v33, 1.0
    %vm71 = vcmp.gt.f32.partialorder %v34, 1.0
    %v72 = vsel %vm68, 1, 0
    %v73 = vsel %vm69, 1, 0
    %v74 = vsel %vm70, 1, 0
    %v75 = vsel %vm71, 1, 0
    %76 = vst [vmem:[%s5] sm:$0xff] %v72
    %77 = vst [vmem:[%s5 + $0x8] sm:$0xff] %v73
    %78 = vst [vmem:[%s5 + $0x10] sm:$0xff] %v74
    %79 = vst [vmem:[%s5 + $0x18] sm:$0xff] %v75
    %vm80 = vcmp.le.f32.partialorder %v31, 3.0
    %vm81 = vcmp.le.f32.partialorder %v32, 3.0
    %vm82 = vcmp.le.f32.partialorder %v33, 3.0
    %vm83 = vcmp.le.f32.partialorder %v34, 3.0
    %v84 = vsel %vm80, 1, 0
    %v85 = vsel %vm81, 1, 0
    %v86 = vsel %vm82, 1, 0
    %v87 = vsel %vm83, 1, 0
    %88 = vst [vmem:[%s6] sm:$0xff] %v84
    %89 = vst [vmem:[%s6 + $0x8] sm:$0xff] %v85
    %90 = vst [vmem:[%s6 + $0x10] sm:$0xff] %v86
    %91 = vst [vmem:[%s6 + $0x18] sm:$0xff] %v87
    // Predicated region
    $region10: #{tpu_custom_call.1} parent=1 // pred_check
      _
    $region11: #{tpu_custom_call.1} parent=1 // pred_check_branch
      %93 = sbr.rel (0) target = $region13
    $region12: #{tpu_custom_call.1} parent=1 // pred_region
      %s95 = ssub.s32 512, 512
      %96 = vsyncadd [#allocation4], %s95
      %s97 = sshll.u32 [#allocation5], 4
      %s98 = int_to_ptr.vmem [resolvable:$true] %s97
      %103 = dma.vmem_to_hbm [thread:$0]  %s98, 512, %s1, [#allocation4], 128, 128, 8
    $region13: #{tpu_custom_call.1} parent=1 // pred_fallthru
      _
    // Predicated region
    $region14: #{tpu_custom_call.1} parent=1 // pred_check
      _
    $region15: #{tpu_custom_call.1} parent=1 // pred_check_branch
      %105 = sbr.rel (0) target = $region17
    $region16: #{tpu_custom_call.1} parent=1 // pred_region
      %s107 = ssub.s32 512, 512
      %108 = vsyncadd [#allocation7], %s107
      %s109 = sshll.u32 [#allocation6], 4
      %s110 = int_to_ptr.vmem [resolvable:$true] %s109
      %115 = dma.vmem_to_hbm [thread:$0]  %s110, 512, %s2, [#allocation7], 128, 128, 8
    $region17: #{tpu_custom_call.1} parent=1 // pred_fallthru
      _
    // Predicated region
    $region18: #{tpu_custom_call.1} parent=1 // pred_check
      _
    $region19: #{tpu_custom_call.1} parent=1 // pred_check_branch
      %117 = sbr.rel (0) target = $region21
    $region20: #{tpu_custom_call.1} parent=1 // pred_region
      %s119 = ssub.s32 512, 512
      %120 = vsyncadd [#allocation7], %s119
      %s121 = sshll.u32 [#allocation8], 4
      %s122 = int_to_ptr.vmem [resolvable:$true] %s121
      %127 = dma.vmem_to_hbm [thread:$0]  %s122, 512, %s3, [#allocation7], 128, 128, 8
    $region21: #{tpu_custom_call.1} parent=1 // pred_fallthru
      _
    // Predicated region
    $region22: #{tpu_custom_call.1} parent=1 // pred_check
      _
    $region23: #{tpu_custom_call.1} parent=1 // pred_check_branch
      %129 = sbr.rel (0) target = $region25
    $region24: #{tpu_custom_call.1} parent=1 // pred_region
      %s131 = ssub.s32 512, 512
      %132 = vsyncadd [#allocation10], %s131
      %s133 = sshll.u32 [#allocation9], 4
      %s134 = int_to_ptr.vmem [resolvable:$true] %s133
      %139 = dma.vmem_to_hbm [thread:$0]  %s134, 512, %s4, [#allocation10], 128, 128, 8
    $region25: #{tpu_custom_call.1} parent=1 // pred_fallthru
      _
    // Predicated region
    $region26: #{tpu_custom_call.1} parent=1 // pred_check
      _
    $region27: #{tpu_custom_call.1} parent=1 // pred_check_branch
      %141 = sbr.rel (0) target = $region29
    $region28: #{tpu_custom_call.1} parent=1 // pred_region
      _
    $region29: #{tpu_custom_call.1} parent=1 // pred_fallthru
      _
    // Predicated region
    $region30: #{tpu_custom_call.1} parent=1 // pred_check
      _
    $region31: #{tpu_custom_call.1} parent=1 // pred_check_branch
      %143 = sbr.rel (0) target = $region33
    $region32: #{tpu_custom_call.1} parent=1 // pred_region
      _
    $region33: #{tpu_custom_call.1} parent=1 // pred_fallthru
      _
    // Predicated region
    $region34: #{tpu_custom_call.1} parent=1 // pred_check
      _
    $region35: #{tpu_custom_call.1} parent=1 // pred_check_branch
      %145 = sbr.rel (0) target = $region37
    $region36: #{tpu_custom_call.1} parent=1 // pred_region
      %146 = dma.done [#allocation4], 512
    $region37: #{tpu_custom_call.1} parent=1 // pred_fallthru
      _
    // Predicated region
    $region38: #{tpu_custom_call.1} parent=1 // pred_check
      _
    $region39: #{tpu_custom_call.1} parent=1 // pred_check_branch
      %148 = sbr.rel (0) target = $region41
    $region40: #{tpu_custom_call.1} parent=1 // pred_region
      %149 = dma.done [#allocation7], 512
    $region41: #{tpu_custom_call.1} parent=1 // pred_fallthru
      _
    // Predicated region
    $region42: #{tpu_custom_call.1} parent=1 // pred_check
      _
    $region43: #{tpu_custom_call.1} parent=1 // pred_check_branch
      %151 = sbr.rel (0) target = $region45
    $region44: #{tpu_custom_call.1} parent=1 // pred_region
      %152 = dma.done [#allocation7], 512
    $region45: #{tpu_custom_call.1} parent=1 // pred_fallthru
      _
    // Predicated region
    $region46: #{tpu_custom_call.1} parent=1 // pred_check
      _
    $region47: #{tpu_custom_call.1} parent=1 // pred_check_branch
      %154 = sbr.rel (0) target = $region49
    $region48: #{tpu_custom_call.1} parent=1 // pred_region
      %155 = dma.done [#allocation10], 512
    $region49: #{tpu_custom_call.1} parent=1 // pred_fallthru
      _
    // Predicated region
    $region50: #{tpu_custom_call.1} parent=1 // pred_check
      _
    $region51: #{tpu_custom_call.1} parent=1 // pred_check_branch
      %157 = sbr.rel (0) target = $region53
    $region52: #{tpu_custom_call.1} parent=1 // pred_region
      _
    $region53: #{tpu_custom_call.1} parent=1 // pred_fallthru
      _
    // Predicated region
    $region54: #{tpu_custom_call.1} parent=1 // pred_check
      _
    $region55: #{tpu_custom_call.1} parent=1 // pred_check_branch
      %159 = sbr.rel (0) target = $region57
    $region56: #{tpu_custom_call.1} parent=1 // pred_region
      _
    $region57: #{tpu_custom_call.1} parent=1 // pred_fallthru
      _
    %160 = vsyncpa [#allocation3], 1
    %161 = vsyncpa [#allocation4], 1
    %162 = vsyncpa [#allocation7], 1
    %163 = vsyncpa [#allocation10], 1

// kernel: tpu_custom_call.1
$region0: #{tpu_custom_call.1}
  #allocation0 [shape = 'u32[]', space=smem, size = 0x4, offset = 0x4, fixed_abs, tag = 'smem constant byte address 0x4 - core index']
  #allocation1 [shape = 'u32[144,128]{1,0:T(1,128)}', space=vmem, size = 0x12000, scoped, tag = 'internal scratch']
  %s0 = inlined_call_operand.hbm [shape: f32[32,128], index: 0, kind: input, shape index: {}]
  %s1 = inlined_call_operand.hbm [shape: f32[32,128], index: 1, kind: output, shape index: {0}]
  %s2 = inlined_call_operand.hbm [shape: f32[32,128], index: 2, kind: output, shape index: {1}]
  %s3 = inlined_call_operand.hbm [shape: f32[32,128], index: 3, kind: output, shape index: {2}]
  %s4 = inlined_call_operand.hbm [shape: f32[32,128], index: 4, kind: output, shape index: {3}]
  %s5 = inlined_call_operand.hbm [shape: s8[32,128], index: 5, kind: output, shape index: {4}]
  %s6 = inlined_call_operand.hbm [shape: s8[32,128], index: 6, kind: output, shape index: {5}]
  %7 = xla_tuple %s1, %s2, %s3, %s4, %s5, %s6
  %s8 = sld [smem:[#allocation0]]
  $region58: #{tpu_custom_call.1} parent=0
    _
  %s10 = ssub.s32 1, %s8
  %s11 = scalar_select 0, %s10, %s8
  $region1: #{tpu_custom_call.1} parent=0
    #allocation2 [shape = 'u8[16384]{0}', space=vmem, size = 0x4000, scoped, tag = 'input window, operand 0, single buffered']
    #allocation3 [shape = 's32[1]{0}', space=sflag, size = 0x4, scoped, tag = 'scoped memory for tpu_custom_call.1']
    #allocation4 [shape = 's32[1]{0}', space=sflag, size = 0x4, scoped, tag = 'scoped memory for tpu_custom_call.1']
    #allocation5 [shape = 'u8[16384]{0}', space=vmem, size = 0x4000, scoped, tag = 'output window, operand 0, single buffered']
    #allocation6 [shape = 'u8[16384]{0}', space=vmem, size = 0x4000, scoped, tag = 'output window, operand 1, single buffered']
    #allocation7 [shape = 's32[1]{0}', space=sflag, size = 0x4, scoped, tag = 'scoped memory for tpu_custom_call.1']
    #allocation8 [shape = 'u8[16384]{0}', space=vmem, size = 0x4000, scoped, tag = 'output window, operand 2, single buffered']
    #allocation9 [shape = 'u8[16384]{0}', space=vmem, size = 0x4000, scoped, tag = 'output window, operand 3, single buffered']
    #allocation10 [shape = 's32[1]{0}', space=sflag, size = 0x4, scoped, tag = 'scoped memory for tpu_custom_call.1']
    #allocation11 [shape = 'u8[4096]{0}', space=vmem, size = 0x1000, scoped, tag = 'output window, operand 4, single buffered']
    #allocation12 [shape = 'u8[4096]{0}', space=vmem, size = 0x1000, scoped, tag = 'output window, operand 5, single buffered']
    #allocation13 [shape = 's32[1]{0}', space=sflag, size = 0x4, scoped, tag = 'scoped memory for tpu_custom_call.1']
    %12 = vsyncpa [#allocation3], 0
    %13 = vsyncpa [#allocation4], 0
    %14 = vsyncpa [#allocation7], 0
    %15 = vsyncpa [#allocation10], 0
    %16 = vsyncpa [#allocation13], 0
    // Predicated region
    $region2: #{tpu_custom_call.1} parent=1 // pred_check
      _
    $region3: #{tpu_custom_call.1} parent=1 // pred_check_branch
      %18 = sbr.rel (0) target = $region5
    $region4: #{tpu_custom_call.1} parent=1 // pred_region
      %s20 = ssub.s32 512, 512
      %21 = vsyncadd [#allocation3], %s20
      %s22 = sshll.u32 [#allocation2], 4
      %s23 = int_to_ptr.vmem [resolvable:$true] %s22
      %28 = dma.hbm_to_vmem [thread:$0]  %s0, 512, %s23, [#allocation3], 128, 128, 8
    $region5: #{tpu_custom_call.1} parent=1 // pred_fallthru
      _
    // Predicated region
    $region6: #{tpu_custom_call.1} parent=1 // pred_check
      _
    $region7: #{tpu_custom_call.1} parent=1 // pred_check_branch
      %30 = sbr.rel (0) target = $region9
    $region8: #{tpu_custom_call.1} parent=1 // pred_region
      %31 = dma.done [#allocation3], 512
    $region9: #{tpu_custom_call.1} parent=1 // pred_fallthru
      _
    %v34 = vld [vmem:[#allocation2] sm:$0xff]
    %v35 = vld [vmem:[#allocation2 + $0x8] sm:$0xff]
    %v36 = vld [vmem:[#allocation2 + $0x10] sm:$0xff]
    %v37 = vld [vmem:[#allocation2 + $0x18] sm:$0xff]
    %v38 = vadd.f32 %v34, 2.0
    %v39 = vadd.f32 %v35, 2.0
    %v40 = vadd.f32 %v36, 2.0
    %v41 = vadd.f32 %v37, 2.0
    %42 = vst [vmem:[#allocation5] sm:$0xff] %v38
    %43 = vst [vmem:[#allocation5 + $0x8] sm:$0xff] %v39
    %44 = vst [vmem:[#allocation5 + $0x10] sm:$0xff] %v40
    %45 = vst [vmem:[#allocation5 + $0x18] sm:$0xff] %v41
    %v46 = vsub.f32 %v34, 3.0
    %v47 = vsub.f32 %v35, 3.0
    %v48 = vsub.f32 %v36, 3.0
    %v49 = vsub.f32 %v37, 3.0
    %50 = vst [vmem:[#allocation6] sm:$0xff] %v46
    %51 = vst [vmem:[#allocation6 + $0x8] sm:$0xff] %v47
    %52 = vst [vmem:[#allocation6 + $0x10] sm:$0xff] %v48
    %53 = vst [vmem:[#allocation6 + $0x18] sm:$0xff] %v49
    %v54 = vmul.f32 %v34, 4.0
    %v55 = vmul.f32 %v35, 4.0
    %v56 = vmul.f32 %v36, 4.0
    %v57 = vmul.f32 %v37, 4.0
    %58 = vst [vmem:[#allocation8] sm:$0xff] %v54
    %59 = vst [vmem:[#allocation8 + $0x8] sm:$0xff] %v55
    %60 = vst [vmem:[#allocation8 + $0x10] sm:$0xff] %v56
    %61 = vst [vmem:[#allocation8 + $0x18] sm:$0xff] %v57
    %v62 = vrcp.pop 5.0
    %v63 = vmul.f32 %v34, %v62
    %v64 = vmul.f32 %v35, %v62
    %v65 = vmul.f32 %v36, %v62
    %v66 = vmul.f32 %v37, %v62
    %67 = vst [vmem:[#allocation9] sm:$0xff] %v63
    %68 = vst [vmem:[#allocation9 + $0x8] sm:$0xff] %v64
    %69 = vst [vmem:[#allocation9 + $0x10] sm:$0xff] %v65
    %70 = vst [vmem:[#allocation9 + $0x18] sm:$0xff] %v66
    %vm71 = vcmp.gt.f32.partialorder %v34, 1.0
    %vm72 = vcmp.gt.f32.partialorder %v35, 1.0
    %vm73 = vcmp.gt.f32.partialorder %v36, 1.0
    %vm74 = vcmp.gt.f32.partialorder %v37, 1.0
    %vm75 = vmpackc.low %vm72, %vm71
    %vm76 = vmpackc.low %vm74, %vm73
    %vm77 = vmpackc.even %vm76, %vm75
    %v78 = vsel %vm77, 16843009, 0
    %79 = vst [vmem:[#allocation11] sm:$0xff] %v78
    %vm80 = vcmp.le.f32.partialorder %v34, 3.0
    %vm81 = vcmp.le.f32.partialorder %v35, 3.0
    %vm82 = vcmp.le.f32.partialorder %v36, 3.0
    %vm83 = vcmp.le.f32.partialorder %v37, 3.0
    %vm84 = vmpackc.low %vm81, %vm80
    %vm85 = vmpackc.low %vm83, %vm82
    %vm86 = vmpackc.even %vm85, %vm84
    %v87 = vsel %vm86, 16843009, 0
    %88 = vst [vmem:[#allocation12] sm:$0xff] %v87
    // Predicated region
    $region10: #{tpu_custom_call.1} parent=1 // pred_check
      _
    $region11: #{tpu_custom_call.1} parent=1 // pred_check_branch
      %90 = sbr.rel (0) target = $region13
    $region12: #{tpu_custom_call.1} parent=1 // pred_region
      %s92 = ssub.s32 512, 512
      %93 = vsyncadd [#allocation4], %s92
      %s94 = sshll.u32 [#allocation5], 4
      %s95 = int_to_ptr.vmem [resolvable:$true] %s94
      %100 = dma.vmem_to_hbm [thread:$0]  %s95, 512, %s1, [#allocation4], 128, 128, 8
    $region13: #{tpu_custom_call.1} parent=1 // pred_fallthru
      _
    // Predicated region
    $region14: #{tpu_custom_call.1} parent=1 // pred_check
      _
    $region15: #{tpu_custom_call.1} parent=1 // pred_check_branch
      %102 = sbr.rel (0) target = $region17
    $region16: #{tpu_custom_call.1} parent=1 // pred_region
      %s104 = ssub.s32 512, 512
      %105 = vsyncadd [#allocation7], %s104
      %s106 = sshll.u32 [#allocation6], 4
      %s107 = int_to_ptr.vmem [resolvable:$true] %s106
      %112 = dma.vmem_to_hbm [thread:$0]  %s107, 512, %s2, [#allocation7], 128, 128, 8
    $region17: #{tpu_custom_call.1} parent=1 // pred_fallthru
      _
    // Predicated region
    $region18: #{tpu_custom_call.1} parent=1 // pred_check
      _
    $region19: #{tpu_custom_call.1} parent=1 // pred_check_branch
      %114 = sbr.rel (0) target = $region21
    $region20: #{tpu_custom_call.1} parent=1 // pred_region
      %s116 = ssub.s32 512, 512
      %117 = vsyncadd [#allocation7], %s116
      %s118 = sshll.u32 [#allocation8], 4
      %s119 = int_to_ptr.vmem [resolvable:$true] %s118
      %124 = dma.vmem_to_hbm [thread:$0]  %s119, 512, %s3, [#allocation7], 128, 128, 8
    $region21: #{tpu_custom_call.1} parent=1 // pred_fallthru
      _
    // Predicated region
    $region22: #{tpu_custom_call.1} parent=1 // pred_check
      _
    $region23: #{tpu_custom_call.1} parent=1 // pred_check_branch
      %126 = sbr.rel (0) target = $region25
    $region24: #{tpu_custom_call.1} parent=1 // pred_region
      %s128 = ssub.s32 512, 512
      %129 = vsyncadd [#allocation10], %s128
      %s130 = sshll.u32 [#allocation9], 4
      %s131 = int_to_ptr.vmem [resolvable:$true] %s130
      %136 = dma.vmem_to_hbm [thread:$0]  %s131, 512, %s4, [#allocation10], 128, 128, 8
    $region25: #{tpu_custom_call.1} parent=1 // pred_fallthru
      _
    // Predicated region
    $region26: #{tpu_custom_call.1} parent=1 // pred_check
      _
    $region27: #{tpu_custom_call.1} parent=1 // pred_check_branch
      %138 = sbr.rel (0) target = $region29
    $region28: #{tpu_custom_call.1} parent=1 // pred_region
      %s140 = ssub.s32 128, 128
      %141 = vsyncadd [#allocation10], %s140
      %s143 = sshll.u32 [#allocation11], 4
      %s144 = int_to_ptr.vmem [resolvable:$true] %s143
      %146 = dma.vmem_to_hbm [thread:$0]  %s144, 128, %s5, [#allocation10]
    $region29: #{tpu_custom_call.1} parent=1 // pred_fallthru
      _
    // Predicated region
    $region30: #{tpu_custom_call.1} parent=1 // pred_check
      _
    $region31: #{tpu_custom_call.1} parent=1 // pred_check_branch
      %148 = sbr.rel (0) target = $region33
    $region32: #{tpu_custom_call.1} parent=1 // pred_region
      %s150 = ssub.s32 128, 128
      %151 = vsyncadd [#allocation13], %s150
      %s153 = sshll.u32 [#allocation12], 4
      %s154 = int_to_ptr.vmem [resolvable:$true] %s153
      %156 = dma.vmem_to_hbm [thread:$0]  %s154, 128, %s6, [#allocation13]
    $region33: #{tpu_custom_call.1} parent=1 // pred_fallthru
      _
    // Predicated region
    $region34: #{tpu_custom_call.1} parent=1 // pred_check
      _
    $region35: #{tpu_custom_call.1} parent=1 // pred_check_branch
      %158 = sbr.rel (0) target = $region37
    $region36: #{tpu_custom_call.1} parent=1 // pred_region
      %159 = dma.done [#allocation4], 512
    $region37: #{tpu_custom_call.1} parent=1 // pred_fallthru
      _
    // Predicated region
    $region38: #{tpu_custom_call.1} parent=1 // pred_check
      _
    $region39: #{tpu_custom_call.1} parent=1 // pred_check_branch
      %161 = sbr.rel (0) target = $region41
    $region40: #{tpu_custom_call.1} parent=1 // pred_region
      %162 = dma.done [#allocation7], 512
    $region41: #{tpu_custom_call.1} parent=1 // pred_fallthru
      _
    // Predicated region
    $region42: #{tpu_custom_call.1} parent=1 // pred_check
      _
    $region43: #{tpu_custom_call.1} parent=1 // pred_check_branch
      %164 = sbr.rel (0) target = $region45
    $region44: #{tpu_custom_call.1} parent=1 // pred_region
      %165 = dma.done [#allocation7], 512
    $region45: #{tpu_custom_call.1} parent=1 // pred_fallthru
      _
    // Predicated region
    $region46: #{tpu_custom_call.1} parent=1 // pred_check
      _
    $region47: #{tpu_custom_call.1} parent=1 // pred_check_branch
      %167 = sbr.rel (0) target = $region49
    $region48: #{tpu_custom_call.1} parent=1 // pred_region
      %168 = dma.done [#allocation10], 512
    $region49: #{tpu_custom_call.1} parent=1 // pred_fallthru
      _
    // Predicated region
    $region50: #{tpu_custom_call.1} parent=1 // pred_check
      _
    $region51: #{tpu_custom_call.1} parent=1 // pred_check_branch
      %170 = sbr.rel (0) target = $region53
    $region52: #{tpu_custom_call.1} parent=1 // pred_region
      %171 = dma.done [#allocation10], 128
    $region53: #{tpu_custom_call.1} parent=1 // pred_fallthru
      _
    // Predicated region
    $region54: #{tpu_custom_call.1} parent=1 // pred_check
      _
    $region55: #{tpu_custom_call.1} parent=1 // pred_check_branch
      %173 = sbr.rel (0) target = $region57
    $region56: #{tpu_custom_call.1} parent=1 // pred_region
      %174 = dma.done [#allocation13], 128
    $region57: #{tpu_custom_call.1} parent=1 // pred_fallthru
      _
    %175 = vsyncpa [#allocation3], 1
    %176 = vsyncpa [#allocation4], 1
    %177 = vsyncpa [#allocation7], 1
    %178 = vsyncpa [#allocation10], 1
    %179 = vsyncpa [#allocation13], 1

</llo_original>
